<compile_context>
chip_gen: v7x
topology: tpu7x:2x2x1
jax: 0.10.0
libtpu: 0.0.40
codegen_flags: <defaults>
</compile_context>

<pallas_src>
import functools

import jax
import jax.numpy as jnp
from jax import lax
from jax.experimental import pallas as pl
from jax.experimental.pallas import tpu as pltpu


def _round_up(n: int, m: int) -> int:
    return (n + m - 1) // m * m


def _ffn_glu_kernel(x_ref, w_ref, v_ref, w2_ref, o_ref, acc_ref):
    # One (row-block i, hidden-block h) grid step.
    #   x_ref  : (bm, D)  input rows (block index invariant along h -> not re-DMA'd)
    #   w_ref  : (bh, D)  tile of W  (torch layout (H, D))
    #   v_ref  : (bh, D)  tile of V
    #   w2_ref : (D, bh)  tile of W2 (torch layout (D, H))
    #   o_ref  : (bm, D)  output rows (written only at the last hidden step)
    #   acc_ref: (bm, D)  f32 accumulator, persists across the hidden axis
    h = pl.program_id(1)

    @pl.when(h == 0)
    def _():
        acc_ref[...] = jnp.zeros_like(acc_ref)

    x = x_ref[...]
    # Contract the feature axis of both operands (== x @ W_tile.T), so torch-layout
    # weights are used directly with no transpose anywhere.
    dn = (((1,), (1,)), ((), ()))
    h1 = lax.dot_general(x, w_ref[...], dn, preferred_element_type=jnp.float32)
    h2 = lax.dot_general(x, v_ref[...], dn, preferred_element_type=jnp.float32)

    # SwiGLU gate in f32 (sigmoid goes to the EUP).
    g = (h1 * jax.nn.sigmoid(h1)) * h2

    # Partial output projection for this hidden tile: (bm, bh) x (D, bh)^T -> (bm, D)
    acc_ref[...] += lax.dot_general(
        g.astype(w2_ref.dtype), w2_ref[...], dn,
        preferred_element_type=jnp.float32)

    @pl.when(h == pl.num_programs(1) - 1)
    def _():
        o_ref[...] = acc_ref[...].astype(o_ref.dtype)


@functools.partial(jax.jit, static_argnames=("block_rows", "block_hidden"))
def feedforward_glu(x, W, V, W2, *, block_rows=256, block_hidden=512):
    """FFN_GLU(x) = (silu(x W^T) * (x V^T)) W2^T   (SwiGLU, no biases).

    x : (..., D).  W, V : (H, D) torch nn.Linear layout.  W2 : (D, H).
    Pass bf16 x/weights to run the MXU in bf16 (accumulation stays f32).
    block_rows / block_hidden are per-shape tunables (256/512-class on v6e/v7x,
    128/256-class on v5e).
    """
    assert block_rows % 8 == 0 and block_hidden % 128 == 0
    D = x.shape[-1]
    H = W.shape[0]
    assert W.shape == (H, D) and V.shape == (H, D) and W2.shape == (D, H)

    out_dtype = x.dtype
    cdt = x.dtype
    W = W.astype(cdt)
    V = V.astype(cdt)
    W2 = W2.astype(cdt)

    lead = x.shape[:-1]
    x2d = x.reshape(-1, D)
    N = x2d.shape[0]

    # Row tiling: clamp block to the 8-aligned row count, pad rows with zeros.
    bm = min(block_rows, _round_up(max(N, 1), 8))
    n_pad = _round_up(N, bm)
    if n_pad != N:
        x2d = jnp.pad(x2d, ((0, n_pad - N), (0, 0)))

    # Hidden tiling: stream weights in 128-aligned tiles. Zero-padding the hidden
    # axis is numerically exact for this op (padded gate columns are silu(0)*0 = 0).
    bh = min(block_hidden, _round_up(H, 128))
    h_pad = _round_up(H, bh)
    if h_pad != H:
        W = jnp.pad(W, ((0, h_pad - H), (0, 0)))
        V = jnp.pad(V, ((0, h_pad - H), (0, 0)))
        W2 = jnp.pad(W2, ((0, 0), (0, h_pad - H)))

    grid = (n_pad // bm, h_pad // bh)

    # Explicit VMEM budget: double-buffered x/W/V/W2/out tiles + f32 accumulator.
    in_bytes = jnp.dtype(cdt).itemsize
    est = 2 * (bm * D + 2 * bh * D + D * bh + bm * D) * in_bytes + bm * D * 4
    vmem_limit = min(max(int(est * 1.3) + (2 << 20), 32 << 20), 120 << 20)

    out = pl.pallas_call(
        _ffn_glu_kernel,
        out_shape=jax.ShapeDtypeStruct((n_pad, D), out_dtype),
        grid_spec=pltpu.PrefetchScalarGridSpec(
            num_scalar_prefetch=0,
            grid=grid,
            in_specs=[
                pl.BlockSpec((bm, D), lambda i, h: (i, 0)),   # x rows
                pl.BlockSpec((bh, D), lambda i, h: (h, 0)),   # W tile
                pl.BlockSpec((bh, D), lambda i, h: (h, 0)),   # V tile
                pl.BlockSpec((D, bh), lambda i, h: (0, h)),   # W2 tile
            ],
            out_specs=pl.BlockSpec((bm, D), lambda i, h: (i, 0)),
            scratch_shapes=[pltpu.VMEM((bm, D), jnp.float32)],
        ),
        compiler_params=pltpu.CompilerParams(
            dimension_semantics=("parallel", "arbitrary"),
            vmem_limit_bytes=vmem_limit,
        ),
    )(x2d, W, V, W2)

    if n_pad != N:
        out = out[:N]
    return out.reshape(*lead, D)


def _reference(x, W, V, W2):
    h1 = x @ W.T
    h2 = x @ V.T
    g = jax.nn.silu(h1) * h2
    return g @ W2.T


if __name__ == "__main__":
    key = jax.random.PRNGKey(0)
    batch, seq, input_size = 2, 16, 128          # lane-dense D (multiple of 128)
    hidden_units = int(4 / 3 * input_size)       # 170, module default

    kx, kw, kv, kw2, kx2 = jax.random.split(key, 5)
    x = jax.random.normal(kx, (batch, seq, input_size), dtype=jnp.float32)

    # torch nn.Linear layout (out_features, in_features), variance-scaling normal init.
    W = jax.random.normal(kw, (hidden_units, input_size), jnp.float32) / jnp.sqrt(
        jnp.float32(input_size))
    V = jax.random.normal(kv, (hidden_units, input_size), jnp.float32) / jnp.sqrt(
        jnp.float32(input_size))
    W2 = jax.random.normal(kw2, (input_size, hidden_units), jnp.float32) / jnp.sqrt(
        jnp.float32(hidden_units))

    # Small blocks for the demo shapes (exercises the 2-step hidden accumulation);
    # production shapes should use the defaults (256 / 512).
    out = feedforward_glu(x, W, V, W2, block_rows=32, block_hidden=128)
    out = jax.block_until_ready(out)
    ref = _reference(x, W, V, W2)
    assert out.shape == x.shape
    assert jnp.allclose(out, ref, atol=1e-3, rtol=1e-3)

    # Ragged row count (exercises row padding) with default block sizes.
    x2 = jax.random.normal(kx2, (5, input_size), dtype=jnp.float32)
    out2 = jax.block_until_ready(feedforward_glu(x2, W, V, W2))
    ref2 = _reference(x2, W, V, W2)
    assert out2.shape == x2.shape
    assert jnp.allclose(out2, ref2, atol=1e-3, rtol=1e-3)

    print("KERNEL_OK")
</pallas_src>

<mosaic_0001>
module attributes {stable_mosaic.version = 11 : i64} {
  func.func @_ffn_glu_kernel(%arg0: i32, %arg1: i32, %arg2: memref<32x128xf32, #tpu.memory_space<vmem>>, %arg3: memref<128x128xf32, #tpu.memory_space<vmem>>, %arg4: memref<128x128xf32, #tpu.memory_space<vmem>>, %arg5: memref<128x128xf32, #tpu.memory_space<vmem>>, %arg6: memref<32x128xf32, #tpu.memory_space<vmem>>, %arg7: memref<32x128xf32, #tpu.memory_space<vmem>>) attributes {dimension_semantics = [#tpu.dimension_semantics<parallel>, #tpu.dimension_semantics<arbitrary>], iteration_bounds = array<i64: 1, 2>, scalar_prefetch = 0 : i64, scratch_operands = 1 : i64, tpu.core_type = #tpu.core_type<tc>, window_params = [{transform_indices = @transform_0, window_bounds = array<i64: 32, 128>}, {transform_indices = @transform_1, window_bounds = array<i64: 128, 128>}, {transform_indices = @transform_2, window_bounds = array<i64: 128, 128>}, {transform_indices = @transform_3, window_bounds = array<i64: 128, 128>}, {transform_indices = @transform_4, window_bounds = array<i64: 32, 128>}]} {
    %c0_i32 = arith.constant 0 : i32
    %0 = arith.cmpi eq, %arg1, %c0_i32 : i32
    %1 = arith.extui %0 : i1 to i32
    %c0_i32_0 = arith.constant 0 : i32
    %2 = arith.cmpi ne, %1, %c0_i32_0 : i32
    scf.if %2 {
      %cst_16 = arith.constant 0.000000e+00 : f32
      %23 = vector.broadcast %cst_16 : f32 to vector<32x128xf32>
      %c0_17 = arith.constant 0 : index
      %c0_18 = arith.constant 0 : index
      %24 = vector.load %arg7[%c0_17, %c0_18] : memref<32x128xf32, #tpu.memory_space<vmem>>, vector<32x128xf32>
      tpu.vector_store %arg7[%c0_17, %c0_18], %23 {strides = array<i32>} : memref<32x128xf32, #tpu.memory_space<vmem>>, vector<32x128xf32>,
    } else {
    }
    %c0 = arith.constant 0 : index
    %c0_1 = arith.constant 0 : index
    %3 = vector.load %arg2[%c0, %c0_1] : memref<32x128xf32, #tpu.memory_space<vmem>>, vector<32x128xf32>
    %c0_2 = arith.constant 0 : index
    %c0_3 = arith.constant 0 : index
    %4 = vector.load %arg3[%c0_2, %c0_3] : memref<128x128xf32, #tpu.memory_space<vmem>>, vector<128x128xf32>
    %cst = arith.constant dense<0.000000e+00> : vector<32x128xf32>
    %5 = tpu.matmul %3, %4, %cst {dimension_numbers = #tpu.dot_dimension_numbers<[1], [1], [0], [0], [0, 0, 1, 0], [], []>} : vector<32x128xf32>, vector<128x128xf32>, vector<32x128xf32> -> vector<32x128xf32>
    %c0_4 = arith.constant 0 : index
    %c0_5 = arith.constant 0 : index
    %6 = vector.load %arg4[%c0_4, %c0_5] : memref<128x128xf32, #tpu.memory_space<vmem>>, vector<128x128xf32>
    %cst_6 = arith.constant dense<0.000000e+00> : vector<32x128xf32>
    %7 = tpu.matmul %3, %6, %cst_6 {dimension_numbers = #tpu.dot_dimension_numbers<[1], [1], [0], [0], [0, 0, 1, 0], [], []>} : vector<32x128xf32>, vector<128x128xf32>, vector<32x128xf32> -> vector<32x128xf32>
    %8 = arith.negf %5 : vector<32x128xf32>
    %9 = math.exp %8 : vector<32x128xf32>
    %cst_7 = arith.constant 1.000000e+00 : f32
    %10 = vector.broadcast %cst_7 : f32 to vector<32x128xf32>
    %11 = arith.addf %10, %9 : vector<32x128xf32>
    %12 = arith.divf %10, %11 : vector<32x128xf32>
    %13 = arith.mulf %5, %12 : vector<32x128xf32>
    %14 = arith.mulf %13, %7 : vector<32x128xf32>
    %c0_8 = arith.constant 0 : index
    %c0_9 = arith.constant 0 : index
    %15 = vector.load %arg7[%c0_8, %c0_9] : memref<32x128xf32, #tpu.memory_space<vmem>>, vector<32x128xf32>
    %c0_10 = arith.constant 0 : index
    %c0_11 = arith.constant 0 : index
    %16 = vector.load %arg5[%c0_10, %c0_11] : memref<128x128xf32, #tpu.memory_space<vmem>>, vector<128x128xf32>
    %cst_12 = arith.constant dense<0.000000e+00> : vector<32x128xf32>
    %17 = tpu.matmul %14, %16, %cst_12 {dimension_numbers = #tpu.dot_dimension_numbers<[1], [1], [0], [0], [0, 0, 1, 0], [], []>} : vector<32x128xf32>, vector<128x128xf32>, vector<32x128xf32> -> vector<32x128xf32>
    %18 = arith.addf %15, %17 : vector<32x128xf32>
    %c0_13 = arith.constant 0 : index
    %c0_14 = arith.constant 0 : index
    %19 = vector.load %arg7[%c0_13, %c0_14] : memref<32x128xf32, #tpu.memory_space<vmem>>, vector<32x128xf32>
    tpu.vector_store %arg7[%c0_13, %c0_14], %18 {strides = array<i32>} : memref<32x128xf32, #tpu.memory_space<vmem>>, vector<32x128xf32>,
    %c1_i32 = arith.constant 1 : i32
    %20 = arith.cmpi eq, %arg1, %c1_i32 : i32
    %21 = arith.extui %20 : i1 to i32
    %c0_i32_15 = arith.constant 0 : i32
    %22 = arith.cmpi ne, %21, %c0_i32_15 : i32
    scf.if %22 {
      %c0_16 = arith.constant 0 : index
      %c0_17 = arith.constant 0 : index
      %23 = vector.load %arg7[%c0_16, %c0_17] : memref<32x128xf32, #tpu.memory_space<vmem>>, vector<32x128xf32>
      %c0_18 = arith.constant 0 : index
      %c0_19 = arith.constant 0 : index
      %24 = vector.load %arg6[%c0_18, %c0_19] : memref<32x128xf32, #tpu.memory_space<vmem>>, vector<32x128xf32>
      tpu.vector_store %arg6[%c0_18, %c0_19], %23 {strides = array<i32>} : memref<32x128xf32, #tpu.memory_space<vmem>>, vector<32x128xf32>,
    } else {
    }
    return
  }
  func.func @transform_0(%arg0: i32, %arg1: i32) -> (i32, i32) {
    %c0_i32 = arith.constant 0 : i32
    %c0_i32_0 = arith.constant 0 : i32
    return %arg0, %c0_i32 : i32, i32
  }
  func.func @transform_1(%arg0: i32, %arg1: i32) -> (i32, i32) {
    %c0_i32 = arith.constant 0 : i32
    %c0_i32_0 = arith.constant 0 : i32
    return %arg1, %c0_i32 : i32, i32
  }
  func.func @transform_2(%arg0: i32, %arg1: i32) -> (i32, i32) {
    %c0_i32 = arith.constant 0 : i32
    %c0_i32_0 = arith.constant 0 : i32
    return %arg1, %c0_i32 : i32, i32
  }
  func.func @transform_3(%arg0: i32, %arg1: i32) -> (i32, i32) {
    %c0_i32 = arith.constant 0 : i32
    %c0_i32_0 = arith.constant 0 : i32
    return %c0_i32, %arg1 : i32, i32
  }
  func.func @transform_4(%arg0: i32, %arg1: i32) -> (i32, i32) {
    %c0_i32 = arith.constant 0 : i32
    %c0_i32_0 = arith.constant 0 : i32
    return %arg0, %c0_i32 : i32, i32
  }
}

</mosaic_0001>

<llo_original>
// kernel: feedforward_glu.1
$region0: #{feedforward_glu.1}
  #allocation0 [shape = 'u32[]', space=smem, size = 0x4, offset = 0x4, fixed_abs, tag = 'smem constant byte address 0x4 - core index']
  #allocation1 [shape = 'u32[144,128]{1,0:T(1,128)}', space=vmem, size = 0x12000, scoped, tag = 'internal scratch']
  #allocation2 [shape = 'f32[32,128]{1,0:T(8,128)}', space=vmem, size = 0x4000, scoped, tag = 'scratch operand']
  %s0 = inlined_call_operand.vmem [shape: f32[32,128], index: 0, kind: input, shape index: {}]
  %s1 = inlined_call_operand.vmem [shape: f32[256,128], index: 1, kind: input, shape index: {}]
  %s2 = inlined_call_operand.vmem [shape: f32[256,128], index: 2, kind: input, shape index: {}]
  %s3 = inlined_call_operand.vmem [shape: f32[128,256], index: 3, kind: input, shape index: {}]
  %s4 = inlined_call_operand.hbm [shape: f32[32,128], index: 4, kind: output, shape index: {}]
  %s5 = sld [smem:[#allocation0]]
  $region95: #{feedforward_glu.1} parent=0
    _
  %s7 = ssub.s32 1, %s5
  %s8 = scalar_select 0, %s7, %s5
  $region1: #{feedforward_glu.1} parent=0
    #allocation3 [shape = 'u8[131072]{0}', space=vmem, size = 0x20000, scoped, tag = 'input window, operand 3']
    #allocation4 [shape = 'u8[16384]{0}', space=vmem, size = 0x4000, scoped, tag = 'output window, operand 0, single buffered']
    #allocation5 [shape = 's32[2]{0}', space=sflag, size = 0x8, scoped, tag = 'scoped memory for feedforward_glu.1']
    %9 = vsyncpa [#allocation5], 0
    loop: start=0, step=1, limit=4
    $region2: #{feedforward_glu.1} parent=1 // loop_pre_header
      _
    $region3: #{feedforward_glu.1} parent=1 // loop_header
      %s11 = sphi 0, %s15
      %p12 = scmp.ge.s32.totalorder %s11, 4
      %s18 = sphi 0, %s30
      %s19 = sphi 0, %s26
      %s20 = sphi 0, %s18
      %s21 = sphi 0, %s19
      %s22 = sphi 0, %s20
      %s23 = sphi 0, %s21
      %s33 = sphi 0, %s35
      %s36 = sphi 0, %s33
      %s37 = sphi 0, %s36
      %s53 = sphi 0, %s37
      %s59 = sphi 0, %s61
      %s62 = sphi 0, %s59
      %s63 = sphi 0, %s62
      %s79 = sphi 0, %s63
      %s85 = sphi 0, %s87
      %s88 = sphi 0, %s85
      %s89 = sphi 0, %s88
      %s105 = sphi 0, %s89
      %s111 = sphi 0, %s113
      %s114 = sphi 0, %s111
      %s115 = sphi 0, %s114
      %s131 = sphi 0, %s115
      %s137 = sphi 0, %s139
      %s140 = sphi 0, %s137
      %s141 = sphi 0, %s140
      %s157 = sphi 0, %s141
    $region4: #{feedforward_glu.1} parent=1 // loop_header_branch
      %14 = sbr.rel (%p12) target = $region8
    $region5: #{feedforward_glu.1} parent=1 // loop_body
      %s16 = ssub.s32 %s11, 1
      %s17 = ssub.s32 %s11, 2
      %s24 = sadd.s32 1, %s19
      %p25 = scmp.ge.s32.totalorder %s24, 2
      %s26 = scalar_select %p25, 0, %s24
      %s27 = sadd.s32 1, %s18
      %s28 = scalar_select %p25, %s27, %s18
      %p29 = scmp.ge.s32.totalorder %s28, 1
      %s30 = scalar_select %p29, 0, %s28
      %s31 = ssub.s32 %s18, %s30
      %p32 = scmp.eq.s32.totalorder %s31, 0
      %s34 = sadd.s32 %s33, 1
      %s35 = scalar_select %p32, %s33, %s34
      %p38 = pneg %p32
      %p39 = scmp.eq.s32.totalorder %s11, 1
      %p40 = por %p38, %p39
      %p41 = scmp.ne.s32.totalorder %s33, %s36
      %p42 = scmp.eq.s32.totalorder %s11, 0
      %p43 = por %p41, %p42
      %p44 = scmp.ne.s32.totalorder %s33, %s36
      %p45 = scmp.eq.s32.totalorder %s16, 1
      %p46 = por %p44, %p45
      %p47 = scmp.ne.s32.totalorder %s36, %s37
      %p48 = scmp.eq.s32.totalorder %s16, 0
      %p49 = por %p47, %p48
      %p50 = scmp.ne.s32.totalorder %s36, %s37
      %p51 = scmp.eq.s32.totalorder %s17, 1
      %p52 = por %p50, %p51
      %p54 = scmp.ne.s32.totalorder %s37, %s53
      %p55 = scmp.eq.s32.totalorder %s17, 0
      %p56 = por %p54, %p55
      %s57 = ssub.s32 %s19, %s26
      %p58 = scmp.eq.s32.totalorder %s57, 0
      %s60 = sadd.s32 %s59, 1
      %s61 = scalar_select %p58, %s59, %s60
      %p64 = pneg %p58
      %p65 = scmp.eq.s32.totalorder %s11, 1
      %p66 = por %p64, %p65
      %p67 = scmp.ne.s32.totalorder %s59, %s62
      %p68 = scmp.eq.s32.totalorder %s11, 0
      %p69 = por %p67, %p68
      %p70 = scmp.ne.s32.totalorder %s59, %s62
      %p71 = scmp.eq.s32.totalorder %s16, 1
      %p72 = por %p70, %p71
      %p73 = scmp.ne.s32.totalorder %s62, %s63
      %p74 = scmp.eq.s32.totalorder %s16, 0
      %p75 = por %p73, %p74
      %p76 = scmp.ne.s32.totalorder %s62, %s63
      %p77 = scmp.eq.s32.totalorder %s17, 1
      %p78 = por %p76, %p77
      %p80 = scmp.ne.s32.totalorder %s63, %s79
      %p81 = scmp.eq.s32.totalorder %s17, 0
      %p82 = por %p80, %p81
      %s83 = ssub.s32 %s19, %s26
      %p84 = scmp.eq.s32.totalorder %s83, 0
      %s86 = sadd.s32 %s85, 1
      %s87 = scalar_select %p84, %s85, %s86
      %p90 = pneg %p84
      %p91 = scmp.eq.s32.totalorder %s11, 1
      %p92 = por %p90, %p91
      %p93 = scmp.ne.s32.totalorder %s85, %s88
      %p94 = scmp.eq.s32.totalorder %s11, 0
      %p95 = por %p93, %p94
      %p96 = scmp.ne.s32.totalorder %s85, %s88
      %p97 = scmp.eq.s32.totalorder %s16, 1
      %p98 = por %p96, %p97
      %p99 = scmp.ne.s32.totalorder %s88, %s89
      %p100 = scmp.eq.s32.totalorder %s16, 0
      %p101 = por %p99, %p100
      %p102 = scmp.ne.s32.totalorder %s88, %s89
      %p103 = scmp.eq.s32.totalorder %s17, 1
      %p104 = por %p102, %p103
      %p106 = scmp.ne.s32.totalorder %s89, %s105
      %p107 = scmp.eq.s32.totalorder %s17, 0
      %p108 = por %p106, %p107
      %s109 = ssub.s32 %s19, %s26
      %p110 = scmp.eq.s32.totalorder %s109, 0
      %s112 = sadd.s32 %s111, 1
      %s113 = scalar_select %p110, %s111, %s112
      %p116 = pneg %p110
      %p117 = scmp.eq.s32.totalorder %s11, 1
      %p118 = por %p116, %p117
      %p119 = scmp.ne.s32.totalorder %s111, %s114
      %p120 = scmp.eq.s32.totalorder %s11, 0
      %p121 = por %p119, %p120
      %p122 = scmp.ne.s32.totalorder %s111, %s114
      %p123 = scmp.eq.s32.totalorder %s16, 1
      %p124 = por %p122, %p123
      %p125 = scmp.ne.s32.totalorder %s114, %s115
      %p126 = scmp.eq.s32.totalorder %s16, 0
      %p127 = por %p125, %p126
      %p128 = scmp.ne.s32.totalorder %s114, %s115
      %p129 = scmp.eq.s32.totalorder %s17, 1
      %p130 = por %p128, %p129
      %p132 = scmp.ne.s32.totalorder %s115, %s131
      %p133 = scmp.eq.s32.totalorder %s17, 0
      %p134 = por %p132, %p133
      %s135 = ssub.s32 %s18, %s30
      %p136 = scmp.eq.s32.totalorder %s135, 0
      %s138 = sadd.s32 %s137, 1
      %s139 = scalar_select %p136, %s137, %s138
      %p142 = pneg %p136
      %p143 = scmp.eq.s32.totalorder %s11, 1
      %p144 = por %p142, %p143
      %p145 = scmp.ne.s32.totalorder %s137, %s140
      %p146 = scmp.eq.s32.totalorder %s11, 0
      %p147 = por %p145, %p146
      %p148 = scmp.ne.s32.totalorder %s137, %s140
      %p149 = scmp.eq.s32.totalorder %s16, 1
      %p150 = por %p148, %p149
      %p151 = scmp.ne.s32.totalorder %s140, %s141
      %p152 = scmp.eq.s32.totalorder %s16, 0
      %p153 = por %p151, %p152
      %p154 = scmp.ne.s32.totalorder %s140, %s141
      %p155 = scmp.eq.s32.totalorder %s17, 1
      %p156 = por %p154, %p155
      %p158 = scmp.ne.s32.totalorder %s141, %s157
      %p159 = scmp.eq.s32.totalorder %s17, 0
      %p160 = por %p158, %p159
      %p161 = scmp.le.s32.totalorder 1, %s11
      %p162 = scmp.lt.s32.totalorder %s11, 3
      %p163 = pnand %p161, %p162
      %p164 = pneg %p163
      // Predicated region
      $region9: #{feedforward_glu.1} parent=5 // pred_check
        _
      $region10: #{feedforward_glu.1} parent=5 // pred_check_branch
        %166 = sbr.rel (%p163) target = $region12
      $region11: #{feedforward_glu.1} parent=5 // pred_region
        %s167 = ssub.s32 %s11, 1
        // Predicated region
        $region13: #{feedforward_glu.1} parent=11 // pred_check
          %p168 = pneg %p49
        $region14: #{feedforward_glu.1} parent=11 // pred_check_branch
          %170 = sbr.rel (%p168) target = $region16
        $region15: #{feedforward_glu.1} parent=11 // pred_region
          %s171 = smul.u32 4, %s20
          %p172 = scmp.lt.s32.totalorder %s171, 3
          %s173 = scalar_select %p172, %s171, 3
          %s174 = smul.addr %s173, 8
          %s175 = scalar_lea.vmem %s0, %s174
          %s176 = smul.u32 4, %s20
        $region16: #{feedforward_glu.1} parent=11 // pred_fallthru
          _
      $region12: #{feedforward_glu.1} parent=5 // pred_fallthru
        _
      %p177 = scmp.lt.s32.totalorder %s11, 2
      // Predicated region
      $region17: #{feedforward_glu.1} parent=5 // pred_check
        %p178 = pneg %p177
      $region18: #{feedforward_glu.1} parent=5 // pred_check_branch
        %180 = sbr.rel (%p178) target = $region20
      $region19: #{feedforward_glu.1} parent=5 // pred_region
        // Predicated region
        $region21: #{feedforward_glu.1} parent=19 // pred_check
          %p181 = pneg %p69
        $region22: #{feedforward_glu.1} parent=19 // pred_check_branch
          %183 = sbr.rel (%p181) target = $region24
        $region23: #{feedforward_glu.1} parent=19 // pred_region
          %s184 = smul.u32 16, %s19
          %p185 = scmp.lt.s32.totalorder %s184, 31
          %s186 = scalar_select %p185, %s184, 31
          %s187 = smul.addr %s186, 8
          %s188 = scalar_lea.vmem %s1, %s187
          %s189 = smul.u32 16, %s19
        $region24: #{feedforward_glu.1} parent=19 // pred_fallthru
          _
        // Predicated region
        $region25: #{feedforward_glu.1} parent=19 // pred_check
          %p190 = pneg %p95
        $region26: #{feedforward_glu.1} parent=19 // pred_check_branch
          %192 = sbr.rel (%p190) target = $region28
        $region27: #{feedforward_glu.1} parent=19 // pred_region
          %s193 = smul.u32 16, %s19
          %p194 = scmp.lt.s32.totalorder %s193, 31
          %s195 = scalar_select %p194, %s193, 31
          %s196 = smul.addr %s195, 8
          %s197 = scalar_lea.vmem %s2, %s196
          %s198 = smul.u32 16, %s19
        $region28: #{feedforward_glu.1} parent=19 // pred_fallthru
          _
        // Predicated region
        $region29: #{feedforward_glu.1} parent=19 // pred_check
          %p199 = pneg %p121
        $region30: #{feedforward_glu.1} parent=19 // pred_check_branch
          %201 = sbr.rel (%p199) target = $region32
        $region31: #{feedforward_glu.1} parent=19 // pred_region
          %s202 = sand.u32 %s111, 1
          %s203 = sand.u32 %s111, 1
          %s204 = smul.addr %s203, 128
          %s205 = scalar_lea.vmem [#allocation3], %s204
          %s206 = smul.addr %s19, 8
          %s207 = scalar_lea.vmem %s3, %s206
          // Predicated region
          $region33: #{feedforward_glu.1} parent=31 // pred_check
            _
          $region34: #{feedforward_glu.1} parent=31 // pred_check_branch
            %209 = sbr.rel (0) target = $region36
          $region35: #{feedforward_glu.1} parent=31 // pred_region
            // Predicated region
            $region37: #{feedforward_glu.1} parent=35 // pred_check
              _
            $region38: #{feedforward_glu.1} parent=35 // pred_check_branch
              %211 = sbr.rel (0) target = $region40
            $region39: #{feedforward_glu.1} parent=35 // pred_region
              // Predicated region
              $region52: #{feedforward_glu.1} parent=39 // pred_check
                _
              $region53: #{feedforward_glu.1} parent=39 // pred_check_branch
                %256 = sbr.rel (0) target = $region55
              $region54: #{feedforward_glu.1} parent=39 // pred_region
                loop: start=0, step=1, limit=1
                $region56: #{feedforward_glu.1} parent=54 // loop_pre_header
                  _
                $region57: #{feedforward_glu.1} parent=54 // loop_header
                  %s258 = sphi 0, %s262
                  %p259 = scmp.ge.s32.totalorder %s258, 1
                  %s263 = sphi %s207, %s207
                  %s264 = sphi %s205, %s205
                $region58: #{feedforward_glu.1} parent=54 // loop_header_branch
                  %261 = sbr.rel (%p259) target = $region62
                $region59: #{feedforward_glu.1} parent=54 // loop_body
                  %v265 = vld [vmem:[%s263] sm:$0xff]
                  %266 = vst [vmem:[%s264] sm:$0xff] %v265
                  %v267 = vld [vmem:[%s263 + $0x10] sm:$0xff]
                  %268 = vst [vmem:[%s264 + $0x8] sm:$0xff] %v267
                  %v269 = vld [vmem:[%s263 + $0x20] sm:$0xff]
                  %270 = vst [vmem:[%s264 + $0x10] sm:$0xff] %v269
                  %v271 = vld [vmem:[%s263 + $0x30] sm:$0xff]
                  %272 = vst [vmem:[%s264 + $0x18] sm:$0xff] %v271
                  %v273 = vld [vmem:[%s263 + $0x40] sm:$0xff]
                  %274 = vst [vmem:[%s264 + $0x20] sm:$0xff] %v273
                  %v275 = vld [vmem:[%s263 + $0x50] sm:$0xff]
                  %276 = vst [vmem:[%s264 + $0x28] sm:$0xff] %v275
                  %v277 = vld [vmem:[%s263 + $0x60] sm:$0xff]
                  %278 = vst [vmem:[%s264 + $0x30] sm:$0xff] %v277
                  %v279 = vld [vmem:[%s263 + $0x70] sm:$0xff]
                  %280 = vst [vmem:[%s264 + $0x38] sm:$0xff] %v279
                  %v281 = vld [vmem:[%s263 + $0x80] sm:$0xff]
                  %282 = vst [vmem:[%s264 + $0x40] sm:$0xff] %v281
                  %v283 = vld [vmem:[%s263 + $0x90] sm:$0xff]
                  %284 = vst [vmem:[%s264 + $0x48] sm:$0xff] %v283
                  %v285 = vld [vmem:[%s263 + $0xa0] sm:$0xff]
                  %286 = vst [vmem:[%s264 + $0x50] sm:$0xff] %v285
                  %v287 = vld [vmem:[%s263 + $0xb0] sm:$0xff]
                  %288 = vst [vmem:[%s264 + $0x58] sm:$0xff] %v287
                  %v289 = vld [vmem:[%s263 + $0xc0] sm:$0xff]
                  %290 = vst [vmem:[%s264 + $0x60] sm:$0xff] %v289
                  %v291 = vld [vmem:[%s263 + $0xd0] sm:$0xff]
                  %292 = vst [vmem:[%s264 + $0x68] sm:$0xff] %v291
                  %v293 = vld [vmem:[%s263 + $0xe0] sm:$0xff]
                  %294 = vst [vmem:[%s264 + $0x70] sm:$0xff] %v293
                  %v295 = vld [vmem:[%s263 + $0xf0] sm:$0xff]
                  %296 = vst [vmem:[%s264 + $0x78] sm:$0xff] %v295
                $region60: #{feedforward_glu.1} parent=54 // loop_footer
                  %s262 = sadd.s32 1, %s258
                $region61: #{feedforward_glu.1} parent=54 // loop_footer_branch
                  %257 = sbr.rel target = $region57
                $region62: #{feedforward_glu.1} parent=54 // loop_exit
                  _
              $region55: #{feedforward_glu.1} parent=39 // pred_fallthru
                _
              // Predicated region
              $region63: #{feedforward_glu.1} parent=39 // pred_check
                _
              $region64: #{feedforward_glu.1} parent=39 // pred_check_branch
                %298 = sbr.rel target = $region66
              $region65: #{feedforward_glu.1} parent=39 // pred_region
                _
              $region66: #{feedforward_glu.1} parent=39 // pred_fallthru
                _
            $region40: #{feedforward_glu.1} parent=35 // pred_fallthru
              _
            // Predicated region
            $region41: #{feedforward_glu.1} parent=35 // pred_check
              _
            $region42: #{feedforward_glu.1} parent=35 // pred_check_branch
              %213 = sbr.rel target = $region44
            $region43: #{feedforward_glu.1} parent=35 // pred_region
              loop: start=0, step=1, limit=1
              $region45: #{feedforward_glu.1} parent=43 // loop_pre_header
                _
              $region46: #{feedforward_glu.1} parent=43 // loop_header
                %s216 = sphi 0, %s220
                %p217 = scmp.ge.s32.totalorder %s216, 1
                %s221 = sphi %s207, %s207
                %s222 = sphi %s205, %s205
              $region47: #{feedforward_glu.1} parent=43 // loop_header_branch
                %219 = sbr.rel (%p217) target = $region51
              $region48: #{feedforward_glu.1} parent=43 // loop_body
                %v223 = vld [vmem:[%s221] sm:$0xff]
                %224 = vst [vmem:[%s222] sm:$0xff] %v223
                %v225 = vld [vmem:[%s221 + $0x10] sm:$0xff]
                %226 = vst [vmem:[%s222 + $0x8] sm:$0xff] %v225
                %v227 = vld [vmem:[%s221 + $0x20] sm:$0xff]
                %228 = vst [vmem:[%s222 + $0x10] sm:$0xff] %v227
                %v229 = vld [vmem:[%s221 + $0x30] sm:$0xff]
                %230 = vst [vmem:[%s222 + $0x18] sm:$0xff] %v229
                %v231 = vld [vmem:[%s221 + $0x40] sm:$0xff]
                %232 = vst [vmem:[%s222 + $0x20] sm:$0xff] %v231
                %v233 = vld [vmem:[%s221 + $0x50] sm:$0xff]
                %234 = vst [vmem:[%s222 + $0x28] sm:$0xff] %v233
                %v235 = vld [vmem:[%s221 + $0x60] sm:$0xff]
                %236 = vst [vmem:[%s222 + $0x30] sm:$0xff] %v235
                %v237 = vld [vmem:[%s221 + $0x70] sm:$0xff]
                %238 = vst [vmem:[%s222 + $0x38] sm:$0xff] %v237
                %v239 = vld [vmem:[%s221 + $0x80] sm:$0xff]
                %240 = vst [vmem:[%s222 + $0x40] sm:$0xff] %v239
                %v241 = vld [vmem:[%s221 + $0x90] sm:$0xff]
                %242 = vst [vmem:[%s222 + $0x48] sm:$0xff] %v241
                %v243 = vld [vmem:[%s221 + $0xa0] sm:$0xff]
                %244 = vst [vmem:[%s222 + $0x50] sm:$0xff] %v243
                %v245 = vld [vmem:[%s221 + $0xb0] sm:$0xff]
                %246 = vst [vmem:[%s222 + $0x58] sm:$0xff] %v245
                %v247 = vld [vmem:[%s221 + $0xc0] sm:$0xff]
                %248 = vst [vmem:[%s222 + $0x60] sm:$0xff] %v247
                %v249 = vld [vmem:[%s221 + $0xd0] sm:$0xff]
                %250 = vst [vmem:[%s222 + $0x68] sm:$0xff] %v249
                %v251 = vld [vmem:[%s221 + $0xe0] sm:$0xff]
                %252 = vst [vmem:[%s222 + $0x70] sm:$0xff] %v251
                %v253 = vld [vmem:[%s221 + $0xf0] sm:$0xff]
                %254 = vst [vmem:[%s222 + $0x78] sm:$0xff] %v253
              $region49: #{feedforward_glu.1} parent=43 // loop_footer
                %s220 = sadd.s32 1, %s216
              $region50: #{feedforward_glu.1} parent=43 // loop_footer_branch
                %215 = sbr.rel target = $region46
              $region51: #{feedforward_glu.1} parent=43 // loop_exit
                _
            $region44: #{feedforward_glu.1} parent=35 // pred_fallthru
              _
          $region36: #{feedforward_glu.1} parent=31 // pred_fallthru
            _
          %299 = vnop
        $region32: #{feedforward_glu.1} parent=19 // pred_fallthru
          _
      $region20: #{feedforward_glu.1} parent=5 // pred_fallthru
        _
      %p300 = scmp.le.s32.totalorder 1, %s11
      %p301 = scmp.lt.s32.totalorder %s11, 3
      %p302 = pnand %p300, %p301
      %p303 = pneg %p302
      // Predicated region
      $region67: #{feedforward_glu.1} parent=5 // pred_check
        _
      $region68: #{feedforward_glu.1} parent=5 // pred_check_branch
        %305 = sbr.rel (%p302) target = $region70
      $region69: #{feedforward_glu.1} parent=5 // pred_region
        %s306 = ssub.s32 %s11, 1
        %s307 = sand.u32 %s114, 1
        %s308 = sand.u32 %s114, 1
        %s309 = smul.addr %s308, 128
        %s310 = scalar_lea.vmem [#allocation3], %s309
        // Predicated region
        $region71: #{feedforward_glu.1} parent=69 // pred_check
          %p311 = pneg %p127
        $region72: #{feedforward_glu.1} parent=69 // pred_check_branch
          %313 = sbr.rel (%p311) target = $region74
        $region73: #{feedforward_glu.1} parent=69 // pred_region
          _
        $region74: #{feedforward_glu.1} parent=69 // pred_fallthru
          _
        %s314 = smul.u32 4, %s20
        %p315 = scmp.lt.s32.totalorder %s314, 3
        %s316 = scalar_select %p315, %s314, 3
        %s317 = smul.addr %s316, 8
        %s318 = scalar_lea.vmem %s0, %s317
        %p319 = pneg %p49
        %p320 = pneg %p46
        %s321 = smul.u32 16, %s21
        %p322 = scmp.lt.s32.totalorder %s321, 31
        %s323 = scalar_select %p322, %s321, 31
        %s324 = smul.addr %s323, 8
        %s325 = scalar_lea.vmem %s1, %s324
        %p326 = pneg %p75
        %p327 = pneg %p72
        %s328 = smul.u32 16, %s21
        %p329 = scmp.lt.s32.totalorder %s328, 31
        %s330 = scalar_select %p329, %s328, 31
        %s331 = smul.addr %s330, 8
        %s332 = scalar_lea.vmem %s2, %s331
        %p333 = pneg %p101
        %p334 = pneg %p98
        %s335 = sand.u32 %s114, 1
        %s336 = sand.u32 %s114, 1
        %s337 = smul.addr %s336, 128
        %s338 = scalar_lea.vmem [#allocation3], %s337
        %p339 = pneg %p127
        %p340 = pneg %p124
        %p341 = pneg %p153
        %p342 = pneg %p150
        %s343 = smul.u32 4, %s20
        %p344 = scmp.lt.s32.totalorder %s343, 3
        %s345 = scalar_select %p344, %s343, 3
        %s346 = smul.addr %s345, 8
        %s347 = scalar_lea.vmem %s0, %s346
        %s348 = smul.u32 4, %s20
        %s349 = smul.u32 16, %s21
        %p350 = scmp.lt.s32.totalorder %s349, 31
        %s351 = scalar_select %p350, %s349, 31
        %s352 = smul.addr %s351, 8
        %s353 = scalar_lea.vmem %s1, %s352
        %s354 = smul.u32 16, %s21
        %s355 = smul.u32 16, %s21
        %p356 = scmp.lt.s32.totalorder %s355, 31
        %s357 = scalar_select %p356, %s355, 31
        %s358 = smul.addr %s357, 8
        %s359 = scalar_lea.vmem %s2, %s358
        %s360 = smul.u32 16, %s21
        %s361 = smul.u32 4, %s20
        %p362 = scmp.eq.s32.totalorder %s21, 0
        // Predicated region
        $region75: #{feedforward_glu.1} parent=69 // pred_check
          %p363 = pneg %p362
        $region76: #{feedforward_glu.1} parent=69 // pred_check_branch
          %365 = sbr.rel (%p363) target = $region78
        $region77: #{feedforward_glu.1} parent=69 // pred_region
          %366 = vst [vmem:[#allocation2] sm:$0xff] 0.0
          %367 = vst [vmem:[#allocation2 + $0x8] sm:$0xff] 0.0
          %368 = vst [vmem:[#allocation2 + $0x10] sm:$0xff] 0.0
          %369 = vst [vmem:[#allocation2 + $0x18] sm:$0xff] 0.0
        $region78: #{feedforward_glu.1} parent=69 // pred_fallthru
          _
        %v370 = vld [vmem:[%s347] sm:$0xff]
        %v371 = vld [vmem:[%s347 + $0x8] sm:$0xff]
        %v372 = vld [vmem:[%s347 + $0x10] sm:$0xff]
        %v373 = vld [vmem:[%s347 + $0x18] sm:$0xff]
        %v374 = vld [vmem:[%s353] sm:$0xff]
        %v375 = vld [vmem:[%s353 + $0x8] sm:$0xff]
        %v376 = vld [vmem:[%s353 + $0x10] sm:$0xff]
        %v377 = vld [vmem:[%s353 + $0x18] sm:$0xff]
        %v378 = vld [vmem:[%s353 + $0x20] sm:$0xff]
        %v379 = vld [vmem:[%s353 + $0x28] sm:$0xff]
        %v380 = vld [vmem:[%s353 + $0x30] sm:$0xff]
        %v381 = vld [vmem:[%s353 + $0x38] sm:$0xff]
        %v382 = vld [vmem:[%s353 + $0x40] sm:$0xff]
        %v383 = vld [vmem:[%s353 + $0x48] sm:$0xff]
        %v384 = vld [vmem:[%s353 + $0x50] sm:$0xff]
        %v385 = vld [vmem:[%s353 + $0x58] sm:$0xff]
        %v386 = vld [vmem:[%s353 + $0x60] sm:$0xff]
        %v387 = vld [vmem:[%s353 + $0x68] sm:$0xff]
        %v388 = vld [vmem:[%s353 + $0x70] sm:$0xff]
        %v389 = vld [vmem:[%s353 + $0x78] sm:$0xff]
        %390 = vmatprep.subr.mxu0 0.0
        %391 = vmatpush1.xpose.msra.mxu0 %v374
        %392 = vmatprep.subr.mxu0 0.0
        %393 = vmatpush1.xpose.msra.mxu0 %v375
        %394 = vmatprep.subr.mxu0 0.0
        %395 = vmatpush1.xpose.msra.mxu0 %v376
        %396 = vmatprep.subr.mxu0 0.0
        %397 = vmatpush1.xpose.msra.mxu0 %v377
        %398 = vmatprep.subr.mxu0 0.0
        %399 = vmatpush1.xpose.msra.mxu0 %v378
        %400 = vmatprep.subr.mxu0 0.0
        %401 = vmatpush1.xpose.msra.mxu0 %v379
        %402 = vmatprep.subr.mxu0 0.0
        %403 = vmatpush1.xpose.msra.mxu0 %v380
        %404 = vmatprep.subr.mxu0 0.0
        %405 = vmatpush1.xpose.msra.mxu0 %v381
        %406 = vmatprep.subr.mxu0 0.0
        %407 = vmatpush1.xpose.msra.mxu0 %v382
        %408 = vmatprep.subr.mxu0 0.0
        %409 = vmatpush1.xpose.msra.mxu0 %v383
        %410 = vmatprep.subr.mxu0 0.0
        %411 = vmatpush1.xpose.msra.mxu0 %v384
        %412 = vmatprep.subr.mxu0 0.0
        %413 = vmatpush1.xpose.msra.mxu0 %v385
        %414 = vmatprep.subr.mxu0 0.0
        %415 = vmatpush1.xpose.msra.mxu0 %v386
        %416 = vmatprep.subr.mxu0 0.0
        %417 = vmatpush1.xpose.msra.mxu0 %v387
        %418 = vmatprep.subr.mxu0 0.0
        %419 = vmatpush1.xpose.msra.mxu0 %v388
        %420 = vmatprep.subr.mxu0 0.0
        %421 = vmatpush1.xpose.msra.mxu0 %v389
        %422 = vmatprep.subr.mxu0 0.0
        %423 = vmatpush1.xpose.msra.mxu0 0.0
        %424 = vmatprep.subr.mxu0 0.0
        %425 = vmatpush1.xpose.msra.mxu0 0.0
        %426 = vmatprep.subr.mxu0 0.0
        %427 = vmatpush1.xpose.msra.mxu0 0.0
        %428 = vmatprep.subr.mxu0 0.0
        %429 = vmatpush1.xpose.msra.mxu0 0.0
        %430 = vmatprep.subr.mxu0 0.0
        %431 = vmatpush1.xpose.msra.mxu0 0.0
        %432 = vmatprep.subr.mxu0 0.0
        %433 = vmatpush1.xpose.msra.mxu0 0.0
        %434 = vmatprep.subr.mxu0 0.0
        %435 = vmatpush1.xpose.msra.mxu0 0.0
        %436 = vmatprep.subr.mxu0 0.0
        %437 = vmatpush1.xpose.msra.mxu0 0.0
        %438 = vmatprep.subr.mxu0 0.0
        %439 = vmatpush1.xpose.msra.mxu0 0.0
        %440 = vmatprep.subr.mxu0 0.0
        %441 = vmatpush1.xpose.msra.mxu0 0.0
        %442 = vmatprep.subr.mxu0 0.0
        %443 = vmatpush1.xpose.msra.mxu0 0.0
        %444 = vmatprep.subr.mxu0 0.0
        %445 = vmatpush1.xpose.msra.mxu0 0.0
        %446 = vmatprep.subr.mxu0 0.0
        %447 = vmatpush1.xpose.msra.mxu0 0.0
        %448 = vmatprep.subr.mxu0 0.0
        %449 = vmatpush1.xpose.msra.mxu0 0.0
        %450 = vmatprep.subr.mxu0 0.0
        %451 = vmatpush1.xpose.msra.mxu0 0.0
        %452 = vmatprep.subr.mxu0 0.0
        %453 = vmatpush1.xpose.msra.mxu0 0.0
        %454 = vmatprep.mubr.f32.mxu0 0.0
        %455 = vmatmul.mubr.f32.gmra.mrb[0].mxu0 %v370
        %v456 = vpop.f32.mrb[0].mxu0
        %v457 = vadd.f32 0.0, %v456
        %v458 = vpop.f32.mrb[0].mxu0
        %459 = vmatprep.mubr.f32.mxu0 0.0
        %460 = vmatmul.mubr.f32.gmra.mrb[0].mxu0 %v371
        %v461 = vpop.f32.mrb[0].mxu0
        %v462 = vadd.f32 0.0, %v461
        %v463 = vpop.f32.mrb[0].mxu0
        %464 = vmatprep.mubr.f32.mxu0 0.0
        %465 = vmatmul.mubr.f32.gmra.mrb[0].mxu0 %v372
        %v466 = vpop.f32.mrb[0].mxu0
        %v467 = vadd.f32 0.0, %v466
        %v468 = vpop.f32.mrb[0].mxu0
        %469 = vmatprep.mubr.f32.mxu0 0.0
        %470 = vmatmul.mubr.f32.gmra.mrb[0].mxu0 %v373
        %v471 = vpop.f32.mrb[0].mxu0
        %v472 = vadd.f32 0.0, %v471
        %v473 = vpop.f32.mrb[0].mxu0
        %474 = vdwg.mxu0
        %v475 = vld [vmem:[%s359] sm:$0xff]
        %v476 = vld [vmem:[%s359 + $0x8] sm:$0xff]
        %v477 = vld [vmem:[%s359 + $0x10] sm:$0xff]
        %v478 = vld [vmem:[%s359 + $0x18] sm:$0xff]
        %v479 = vld [vmem:[%s359 + $0x20] sm:$0xff]
        %v480 = vld [vmem:[%s359 + $0x28] sm:$0xff]
        %v481 = vld [vmem:[%s359 + $0x30] sm:$0xff]
        %v482 = vld [vmem:[%s359 + $0x38] sm:$0xff]
        %v483 = vld [vmem:[%s359 + $0x40] sm:$0xff]
        %v484 = vld [vmem:[%s359 + $0x48] sm:$0xff]
        %v485 = vld [vmem:[%s359 + $0x50] sm:$0xff]
        %v486 = vld [vmem:[%s359 + $0x58] sm:$0xff]
        %v487 = vld [vmem:[%s359 + $0x60] sm:$0xff]
        %v488 = vld [vmem:[%s359 + $0x68] sm:$0xff]
        %v489 = vld [vmem:[%s359 + $0x70] sm:$0xff]
        %v490 = vld [vmem:[%s359 + $0x78] sm:$0xff]
        %491 = vmatprep.subr.mxu0 0.0
        %492 = vmatpush1.xpose.msra.mxu0 %v475
        %493 = vmatprep.subr.mxu0 0.0
        %494 = vmatpush1.xpose.msra.mxu0 %v476
        %495 = vmatprep.subr.mxu0 0.0
        %496 = vmatpush1.xpose.msra.mxu0 %v477
        %497 = vmatprep.subr.mxu0 0.0
        %498 = vmatpush1.xpose.msra.mxu0 %v478
        %499 = vmatprep.subr.mxu0 0.0
        %500 = vmatpush1.xpose.msra.mxu0 %v479
        %501 = vmatprep.subr.mxu0 0.0
        %502 = vmatpush1.xpose.msra.mxu0 %v480
        %503 = vmatprep.subr.mxu0 0.0
        %504 = vmatpush1.xpose.msra.mxu0 %v481
        %505 = vmatprep.subr.mxu0 0.0
        %506 = vmatpush1.xpose.msra.mxu0 %v482
        %507 = vmatprep.subr.mxu0 0.0
        %508 = vmatpush1.xpose.msra.mxu0 %v483
        %509 = vmatprep.subr.mxu0 0.0
        %510 = vmatpush1.xpose.msra.mxu0 %v484
        %511 = vmatprep.subr.mxu0 0.0
        %512 = vmatpush1.xpose.msra.mxu0 %v485
        %513 = vmatprep.subr.mxu0 0.0
        %514 = vmatpush1.xpose.msra.mxu0 %v486
        %515 = vmatprep.subr.mxu0 0.0
        %516 = vmatpush1.xpose.msra.mxu0 %v487
        %517 = vmatprep.subr.mxu0 0.0
        %518 = vmatpush1.xpose.msra.mxu0 %v488
        %519 = vmatprep.subr.mxu0 0.0
        %520 = vmatpush1.xpose.msra.mxu0 %v489
        %521 = vmatprep.subr.mxu0 0.0
        %522 = vmatpush1.xpose.msra.mxu0 %v490
        %523 = vmatprep.subr.mxu0 0.0
        %524 = vmatpush1.xpose.msra.mxu0 0.0
        %525 = vmatprep.subr.mxu0 0.0
        %526 = vmatpush1.xpose.msra.mxu0 0.0
        %527 = vmatprep.subr.mxu0 0.0
        %528 = vmatpush1.xpose.msra.mxu0 0.0
        %529 = vmatprep.subr.mxu0 0.0
        %530 = vmatpush1.xpose.msra.mxu0 0.0
        %531 = vmatprep.subr.mxu0 0.0
        %532 = vmatpush1.xpose.msra.mxu0 0.0
        %533 = vmatprep.subr.mxu0 0.0
        %534 = vmatpush1.xpose.msra.mxu0 0.0
        %535 = vmatprep.subr.mxu0 0.0
        %536 = vmatpush1.xpose.msra.mxu0 0.0
        %537 = vmatprep.subr.mxu0 0.0
        %538 = vmatpush1.xpose.msra.mxu0 0.0
        %539 = vmatprep.subr.mxu0 0.0
        %540 = vmatpush1.xpose.msra.mxu0 0.0
        %541 = vmatprep.subr.mxu0 0.0
        %542 = vmatpush1.xpose.msra.mxu0 0.0
        %543 = vmatprep.subr.mxu0 0.0
        %544 = vmatpush1.xpose.msra.mxu0 0.0
        %545 = vmatprep.subr.mxu0 0.0
        %546 = vmatpush1.xpose.msra.mxu0 0.0
        %547 = vmatprep.subr.mxu0 0.0
        %548 = vmatpush1.xpose.msra.mxu0 0.0
        %549 = vmatprep.subr.mxu0 0.0
        %550 = vmatpush1.xpose.msra.mxu0 0.0
        %551 = vmatprep.subr.mxu0 0.0
        %552 = vmatpush1.xpose.msra.mxu0 0.0
        %553 = vmatprep.subr.mxu0 0.0
        %554 = vmatpush1.xpose.msra.mxu0 0.0
        %555 = vmatprep.mubr.f32.mxu0 0.0
        %556 = vmatmul.mubr.f32.gmra.mrb[0].mxu0 %v370
        %v557 = vpop.f32.mrb[0].mxu0
        %v558 = vadd.f32 0.0, %v557
        %v559 = vpop.f32.mrb[0].mxu0
        %560 = vmatprep.mubr.f32.mxu0 0.0
        %561 = vmatmul.mubr.f32.gmra.mrb[0].mxu0 %v371
        %v562 = vpop.f32.mrb[0].mxu0
        %v563 = vadd.f32 0.0, %v562
        %v564 = vpop.f32.mrb[0].mxu0
        %565 = vmatprep.mubr.f32.mxu0 0.0
        %566 = vmatmul.mubr.f32.gmra.mrb[0].mxu0 %v372
        %v567 = vpop.f32.mrb[0].mxu0
        %v568 = vadd.f32 0.0, %v567
        %v569 = vpop.f32.mrb[0].mxu0
        %570 = vmatprep.mubr.f32.mxu0 0.0
        %571 = vmatmul.mubr.f32.gmra.mrb[0].mxu0 %v373
        %v572 = vpop.f32.mrb[0].mxu0
        %v573 = vadd.f32 0.0, %v572
        %v574 = vpop.f32.mrb[0].mxu0
        %575 = vdwg.mxu0
        %v576 = vxor.u32 %v457, 2147483648
        %v577 = vxor.u32 %v462, 2147483648
        %v578 = vxor.u32 %v467, 2147483648
        %v579 = vxor.u32 %v472, 2147483648
        %v580 = vmul.f32 %v576, 1.442695
        %v581 = vpow.pop %v580
        %v582 = vmul.f32 %v577, 1.442695
        %v583 = vpow.pop %v582
        %v584 = vmul.f32 %v578, 1.442695
        %v585 = vpow.pop %v584
        %v586 = vmul.f32 %v579, 1.442695
        %v587 = vpow.pop %v586
        %v588 = vadd.f32 %v581, 1.0
        %v589 = vadd.f32 %v583, 1.0
        %v590 = vadd.f32 %v585, 1.0
        %v591 = vadd.f32 %v587, 1.0
        %v592 = vrcp.pop %v588
        %v593 = vmul.f32 1.0, %v592
        %v594 = vrcp.pop %v589
        %v595 = vmul.f32 1.0, %v594
        %v596 = vrcp.pop %v590
        %v597 = vmul.f32 1.0, %v596
        %v598 = vrcp.pop %v591
        %v599 = vmul.f32 1.0, %v598
        %v600 = vmul.f32 %v457, %v593
        %v601 = vmul.f32 %v462, %v595
        %v602 = vmul.f32 %v467, %v597
        %v603 = vmul.f32 %v472, %v599
        %v604 = vmul.f32 %v600, %v558
        %v605 = vmul.f32 %v601, %v563
        %v606 = vmul.f32 %v602, %v568
        %v607 = vmul.f32 %v603, %v573
        %v608 = vld [vmem:[#allocation2] sm:$0xff]
        %v609 = vld [vmem:[#allocation2 + $0x8] sm:$0xff]
        %v610 = vld [vmem:[#allocation2 + $0x10] sm:$0xff]
        %v611 = vld [vmem:[#allocation2 + $0x18] sm:$0xff]
        %v612 = vld [vmem:[%s310] sm:$0xff]
        %v613 = vld [vmem:[%s310 + $0x8] sm:$0xff]
        %v614 = vld [vmem:[%s310 + $0x10] sm:$0xff]
        %v615 = vld [vmem:[%s310 + $0x18] sm:$0xff]
        %v616 = vld [vmem:[%s310 + $0x20] sm:$0xff]
        %v617 = vld [vmem:[%s310 + $0x28] sm:$0xff]
        %v618 = vld [vmem:[%s310 + $0x30] sm:$0xff]
        %v619 = vld [vmem:[%s310 + $0x38] sm:$0xff]
        %v620 = vld [vmem:[%s310 + $0x40] sm:$0xff]
        %v621 = vld [vmem:[%s310 + $0x48] sm:$0xff]
        %v622 = vld [vmem:[%s310 + $0x50] sm:$0xff]
        %v623 = vld [vmem:[%s310 + $0x58] sm:$0xff]
        %v624 = vld [vmem:[%s310 + $0x60] sm:$0xff]
        %v625 = vld [vmem:[%s310 + $0x68] sm:$0xff]
        %v626 = vld [vmem:[%s310 + $0x70] sm:$0xff]
        %v627 = vld [vmem:[%s310 + $0x78] sm:$0xff]
        %628 = vmatprep.subr.mxu0 0.0
        %629 = vmatpush1.xpose.msra.mxu0 %v612
        %630 = vmatprep.subr.mxu0 0.0
        %631 = vmatpush1.xpose.msra.mxu0 %v613
        %632 = vmatprep.subr.mxu0 0.0
        %633 = vmatpush1.xpose.msra.mxu0 %v614
        %634 = vmatprep.subr.mxu0 0.0
        %635 = vmatpush1.xpose.msra.mxu0 %v615
        %636 = vmatprep.subr.mxu0 0.0
        %637 = vmatpush1.xpose.msra.mxu0 %v616
        %638 = vmatprep.subr.mxu0 0.0
        %639 = vmatpush1.xpose.msra.mxu0 %v617
        %640 = vmatprep.subr.mxu0 0.0
        %641 = vmatpush1.xpose.msra.mxu0 %v618
        %642 = vmatprep.subr.mxu0 0.0
        %643 = vmatpush1.xpose.msra.mxu0 %v619
        %644 = vmatprep.subr.mxu0 0.0
        %645 = vmatpush1.xpose.msra.mxu0 %v620
        %646 = vmatprep.subr.mxu0 0.0
        %647 = vmatpush1.xpose.msra.mxu0 %v621
        %648 = vmatprep.subr.mxu0 0.0
        %649 = vmatpush1.xpose.msra.mxu0 %v622
        %650 = vmatprep.subr.mxu0 0.0
        %651 = vmatpush1.xpose.msra.mxu0 %v623
        %652 = vmatprep.subr.mxu0 0.0
        %653 = vmatpush1.xpose.msra.mxu0 %v624
        %654 = vmatprep.subr.mxu0 0.0
        %655 = vmatpush1.xpose.msra.mxu0 %v625
        %656 = vmatprep.subr.mxu0 0.0
        %657 = vmatpush1.xpose.msra.mxu0 %v626
        %658 = vmatprep.subr.mxu0 0.0
        %659 = vmatpush1.xpose.msra.mxu0 %v627
        %660 = vmatprep.subr.mxu0 0.0
        %661 = vmatpush1.xpose.msra.mxu0 0.0
        %662 = vmatprep.subr.mxu0 0.0
        %663 = vmatpush1.xpose.msra.mxu0 0.0
        %664 = vmatprep.subr.mxu0 0.0
        %665 = vmatpush1.xpose.msra.mxu0 0.0
        %666 = vmatprep.subr.mxu0 0.0
        %667 = vmatpush1.xpose.msra.mxu0 0.0
        %668 = vmatprep.subr.mxu0 0.0
        %669 = vmatpush1.xpose.msra.mxu0 0.0
        %670 = vmatprep.subr.mxu0 0.0
        %671 = vmatpush1.xpose.msra.mxu0 0.0
        %672 = vmatprep.subr.mxu0 0.0
        %673 = vmatpush1.xpose.msra.mxu0 0.0
        %674 = vmatprep.subr.mxu0 0.0
        %675 = vmatpush1.xpose.msra.mxu0 0.0
        %676 = vmatprep.subr.mxu0 0.0
        %677 = vmatpush1.xpose.msra.mxu0 0.0
        %678 = vmatprep.subr.mxu0 0.0
        %679 = vmatpush1.xpose.msra.mxu0 0.0
        %680 = vmatprep.subr.mxu0 0.0
        %681 = vmatpush1.xpose.msra.mxu0 0.0
        %682 = vmatprep.subr.mxu0 0.0
        %683 = vmatpush1.xpose.msra.mxu0 0.0
        %684 = vmatprep.subr.mxu0 0.0
        %685 = vmatpush1.xpose.msra.mxu0 0.0
        %686 = vmatprep.subr.mxu0 0.0
        %687 = vmatpush1.xpose.msra.mxu0 0.0
        %688 = vmatprep.subr.mxu0 0.0
        %689 = vmatpush1.xpose.msra.mxu0 0.0
        %690 = vmatprep.subr.mxu0 0.0
        %691 = vmatpush1.xpose.msra.mxu0 0.0
        %692 = vmatprep.mubr.f32.mxu0 0.0
        %693 = vmatmul.mubr.f32.gmra.mrb[0].mxu0 %v604
        %v694 = vpop.f32.mrb[0].mxu0
        %v695 = vadd.f32 0.0, %v694
        %v696 = vpop.f32.mrb[0].mxu0
        %697 = vmatprep.mubr.f32.mxu0 0.0
        %698 = vmatmul.mubr.f32.gmra.mrb[0].mxu0 %v605
        %v699 = vpop.f32.mrb[0].mxu0
        %v700 = vadd.f32 0.0, %v699
        %v701 = vpop.f32.mrb[0].mxu0
        %702 = vmatprep.mubr.f32.mxu0 0.0
        %703 = vmatmul.mubr.f32.gmra.mrb[0].mxu0 %v606
        %v704 = vpop.f32.mrb[0].mxu0
        %v705 = vadd.f32 0.0, %v704
        %v706 = vpop.f32.mrb[0].mxu0
        %707 = vmatprep.mubr.f32.mxu0 0.0
        %708 = vmatmul.mubr.f32.gmra.mrb[0].mxu0 %v607
        %v709 = vpop.f32.mrb[0].mxu0
        %v710 = vadd.f32 0.0, %v709
        %v711 = vpop.f32.mrb[0].mxu0
        %712 = vdwg.mxu0
        %v713 = vadd.f32 %v608, %v695
        %v714 = vadd.f32 %v609, %v700
        %v715 = vadd.f32 %v610, %v705
        %v716 = vadd.f32 %v611, %v710
        %717 = vst [vmem:[#allocation2] sm:$0xff] %v713
        %718 = vst [vmem:[#allocation2 + $0x8] sm:$0xff] %v714
        %719 = vst [vmem:[#allocation2 + $0x10] sm:$0xff] %v715
        %720 = vst [vmem:[#allocation2 + $0x18] sm:$0xff] %v716
        %p721 = scmp.eq.s32.totalorder %s21, 1
        // Predicated region
        $region79: #{feedforward_glu.1} parent=69 // pred_check
          %p722 = pneg %p721
        $region80: #{feedforward_glu.1} parent=69 // pred_check_branch
          %724 = sbr.rel (%p722) target = $region82
        $region81: #{feedforward_glu.1} parent=69 // pred_region
          %v725 = vld [vmem:[#allocation2] sm:$0xff]
          %v726 = vld [vmem:[#allocation2 + $0x8] sm:$0xff]
          %v727 = vld [vmem:[#allocation2 + $0x10] sm:$0xff]
          %v728 = vld [vmem:[#allocation2 + $0x18] sm:$0xff]
          %729 = vst [vmem:[#allocation4] sm:$0xff] %v725
          %730 = vst [vmem:[#allocation4 + $0x8] sm:$0xff] %v726
          %731 = vst [vmem:[#allocation4 + $0x10] sm:$0xff] %v727
          %732 = vst [vmem:[#allocation4 + $0x18] sm:$0xff] %v728
        $region82: #{feedforward_glu.1} parent=69 // pred_fallthru
          _
        // Predicated region
        $region83: #{feedforward_glu.1} parent=69 // pred_check
          %p733 = pneg %p150
        $region84: #{feedforward_glu.1} parent=69 // pred_check_branch
          %735 = sbr.rel (%p733) target = $region86
        $region85: #{feedforward_glu.1} parent=69 // pred_region
          %s736 = smul.u32 4, %s20
          %s738 = ssub.s32 512, 512
          %739 = vsyncadd [#allocation5], %s738
          %s740 = smul.addr %s736, 128
          %s741 = scalar_lea.hbm %s4, %s740
          %s742 = sshll.u32 [#allocation4], 4
          %s743 = int_to_ptr.vmem [resolvable:$true] %s742
          %748 = dma.vmem_to_hbm [thread:$0]  %s743, 512, %s741, [#allocation5], 128, 128, 8
        $region86: #{feedforward_glu.1} parent=69 // pred_fallthru
          _
        // Predicated region
        $region87: #{feedforward_glu.1} parent=69 // pred_check
          %p749 = pneg %p150
        $region88: #{feedforward_glu.1} parent=69 // pred_check_branch
          %751 = sbr.rel (%p749) target = $region90
        $region89: #{feedforward_glu.1} parent=69 // pred_region
          %752 = dma.done [#allocation5], 512
        $region90: #{feedforward_glu.1} parent=69 // pred_fallthru
          _
      $region70: #{feedforward_glu.1} parent=5 // pred_fallthru
        _
      %p753 = scmp.le.s32.totalorder 2, %s11
      // Predicated region
      $region91: #{feedforward_glu.1} parent=5 // pred_check
        %p754 = pneg %p753
      $region92: #{feedforward_glu.1} parent=5 // pred_check_branch
        %756 = sbr.rel (%p754) target = $region94
      $region93: #{feedforward_glu.1} parent=5 // pred_region
        %s757 = ssub.s32 %s11, 2
      $region94: #{feedforward_glu.1} parent=5 // pred_fallthru
        _
    $region6: #{feedforward_glu.1} parent=1 // loop_footer
      %s15 = sadd.s32 1, %s11
    $region7: #{feedforward_glu.1} parent=1 // loop_footer_branch
      %10 = sbr.rel target = $region3
    $region8: #{feedforward_glu.1} parent=1 // loop_exit
      _
    %758 = vsyncpa [#allocation5], 1
    %s759 = scalar_lea.sflag [#allocation5], 1
    %760 = vsyncpa %s759, 1

</llo_original>
